<compile_context>
chip_gen: v5e
topology: v5e:2x2
jax: 0.10.0
libtpu: 0.0.40
codegen_flags: <defaults>
</compile_context>

<pallas_src>
import functools

import jax
import jax.numpy as jnp
from jax import lax
from jax.experimental import pallas as pl
from jax.experimental.pallas import tpu as pltpu

_EPS = 1e-5


def _round_up(x, m):
    return ((x + m - 1) // m) * m


def _vmem_budget_bytes():
    """75% of per-TensorCore VMEM (v5e/v6e: 128 MiB, v7x: 64 MiB)."""
    try:
        info = pltpu.get_tpu_info()
        cap = int(getattr(info, "vmem_capacity_bytes", 64 << 20))
    except Exception:
        cap = 64 << 20        # conservative fallback (v7x-sized)
    return (cap * 3) // 4


# ----------------------------------------------------------------------------
# Fused kernel: per-image conv (2 matmuls per row tile) + BN-stat accumulation,
# with the (M, Op) conv result resident in VMEM and a BN+ReLU epilogue.
# ----------------------------------------------------------------------------
def _fused_conv_bn_relu_kernel(zz_ref, w_ref, gb_ref, o_ref, sum_ref, ssq_ref, *,
                               n_img, m_img, wo, tm_i, inv_count):
    n = pl.program_id(0)
    n_inner = m_img // tm_i

    @pl.when(n == 0)
    def _():
        sum_ref[...] = jnp.zeros_like(sum_ref)
        ssq_ref[...] = jnp.zeros_like(ssq_ref)

    base = n * m_img

    @pl.loop(0, n_inner)
    def _(t):
        p0 = pl.multiple_of(t * tm_i, tm_i)
        lhs0 = zz_ref[pl.ds(p0, tm_i), :]          # rows p       (kh in {0,1})
        lhs1 = zz_ref[pl.ds(p0 + wo, tm_i), :]     # rows p + Wo  (kh in {2,3})
        acc = (jnp.dot(lhs0, w_ref[0], preferred_element_type=jnp.float32)
               + jnp.dot(lhs1, w_ref[1], preferred_element_type=jnp.float32))
        sum_ref[...] += jnp.sum(acc, axis=0, keepdims=True)
        ssq_ref[...] += jnp.sum(acc * acc, axis=0, keepdims=True)
        o_ref[pl.ds(base + p0, tm_i), :] = acc.astype(o_ref.dtype)

    @pl.when(n == n_img - 1)
    def _():
        mean = sum_ref[...] * inv_count
        var = jnp.maximum(ssq_ref[...] * inv_count - mean * mean, 0.0)  # biased var
        scale = gb_ref[0:1, :] * lax.rsqrt(var + _EPS)
        shift = gb_ref[1:2, :] - mean * scale

        @pl.loop(0, n_img * n_inner)
        def _(t):
            r0 = pl.multiple_of(t * tm_i, tm_i)
            v = o_ref[pl.ds(r0, tm_i), :].astype(jnp.float32)
            o_ref[pl.ds(r0, tm_i), :] = jnp.maximum(
                v * scale + shift, 0.0).astype(o_ref.dtype)


# ----------------------------------------------------------------------------
# Two-pass fallback.  Pass A: per-image conv + partial sum / sum-of-squares.
# ----------------------------------------------------------------------------
def _conv_stats_kernel(zz_ref, w_ref, o_ref, stat_ref, *, m_img, wo, tm_i):
    n_inner = m_img // tm_i
    stat_ref[...] = jnp.zeros_like(stat_ref)

    @pl.loop(0, n_inner)
    def _(t):
        p0 = pl.multiple_of(t * tm_i, tm_i)
        lhs0 = zz_ref[pl.ds(p0, tm_i), :]
        lhs1 = zz_ref[pl.ds(p0 + wo, tm_i), :]
        acc = (jnp.dot(lhs0, w_ref[0], preferred_element_type=jnp.float32)
               + jnp.dot(lhs1, w_ref[1], preferred_element_type=jnp.float32))
        stat_ref[0:1, :] += jnp.sum(acc, axis=0, keepdims=True)
        stat_ref[1:2, :] += jnp.sum(acc * acc, axis=0, keepdims=True)
        o_ref[pl.ds(p0, tm_i), :] = acc.astype(o_ref.dtype)


# Pass B: tiled normalize + ReLU (scale/shift precomputed from global stats).
def _bn_relu_kernel(x_ref, ss_ref, o_ref):
    x = x_ref[...].astype(jnp.float32)
    o_ref[...] = jnp.maximum(x * ss_ref[0:1, :] + ss_ref[1:2, :], 0.0)


# ----------------------------------------------------------------------------
# Wrapper: NCHW in/out; reflect-pad + space-to-depth glue in JAX, hot path Pallas.
# ----------------------------------------------------------------------------
def unet_block_forward(x_nchw, weight_ocihw, gamma, beta, *,
                       use_bf16=True, force_two_pass=False,
                       force_bf16_resident=False):
    N, Cin, H, W = x_nchw.shape
    O, Cin_w, KH, KW = weight_ocihw.shape
    assert (KH, KW) == (4, 4) and Cin_w == Cin
    assert H % 2 == 0 and W % 2 == 0
    Ho, Wo = H // 2, W // 2
    M_img = Ho * Wo
    M = N * M_img
    K8 = 8 * Cin
    Op = _round_up(O, 128)
    R_img = (Ho + 1) * Wo

    gemm_dtype = jnp.bfloat16 if use_bf16 else jnp.float32
    esize = 2 if use_bf16 else 4

    # ---- input glue: reflect pad -> space-to-depth -> width pairing (ZZ) ----
    # ZZ[n, i*Wo+ow, b*4Cin + (2r+s)*Cin + c] = xp[n, 2i+r, 2ow + 2b + s, c]
    x = jnp.transpose(x_nchw, (0, 2, 3, 1)).astype(gemm_dtype)          # NHWC
    xp = jnp.pad(x, ((0, 0), (1, 1), (1, 1), (0, 0)), mode="reflect")
    xs = xp.reshape(N, Ho + 1, 2, Wo + 1, 2, Cin)
    xs = jnp.transpose(xs, (0, 1, 3, 2, 4, 5)).reshape(N, Ho + 1, Wo + 1, 4 * Cin)
    zz = jnp.concatenate([xs[:, :, :Wo, :], xs[:, :, 1:, :]], axis=-1)  # (N,Ho+1,Wo,8Cin)
    zz = zz.reshape(N, R_img, K8)

    # ---- weights -> two (K8, Op) matrices (a = 0/1), kept resident in VMEM ----
    wt = jnp.transpose(weight_ocihw, (2, 3, 1, 0)).astype(gemm_dtype)   # (kh,kw,Cin,O)

    def _wa(a):
        blocks = [wt[2 * a + r, 2 * b + s]
                  for b in (0, 1) for r in (0, 1) for s in (0, 1)]
        return jnp.concatenate(blocks, axis=0)                          # (8Cin, O)

    w2 = jnp.stack([_wa(0), _wa(1)], axis=0)                            # (2, K8, O)
    w2 = jnp.pad(w2, ((0, 0), (0, 0), (0, Op - O)))

    gamma_p = jnp.pad(gamma.astype(jnp.float32).reshape(1, O), ((0, 0), (0, Op - O)))
    beta_p = jnp.pad(beta.astype(jnp.float32).reshape(1, O), ((0, 0), (0, Op - O)))
    gb = jnp.concatenate([gamma_p, beta_p], axis=0)                     # (2, Op)

    # ---- in-kernel row tile: multiple of Wo (keeps the +Wo slice aligned),
    #      divides M_img exactly, <= 512 rows to bound temporaries ----
    r = 1
    while Ho % (r * 2) == 0 and Wo * r * 2 <= 512:
        r *= 2
    tm_i = Wo * r

    # ---- path selection under a device-aware VMEM budget ----
    budget = _vmem_budget_bytes()
    zz_img_bytes = R_img * K8 * esize
    w_bytes = 2 * K8 * Op * esize
    work_bytes = (2 * zz_img_bytes + 2 * w_bytes
                  + 2 * tm_i * Op * 4 + 4 * tm_i * K8 * esize + (4 << 20))
    res_f32 = M * Op * 4
    res_bf16 = M * Op * 2

    mode = "two_pass"
    res_dtype = jnp.float32
    if not force_two_pass:
        if (not force_bf16_resident) and res_f32 + work_bytes <= budget:
            mode, res_dtype = "fused", jnp.float32
        elif res_bf16 + work_bytes <= budget:
            mode, res_dtype = "fused", jnp.bfloat16

    if mode == "fused":
        res_bytes = res_f32 if res_dtype == jnp.float32 else res_bf16
        vmem_limit = int(min(max(res_bytes + work_bytes + (8 << 20), 32 << 20), budget))
        kernel = functools.partial(
            _fused_conv_bn_relu_kernel,
            n_img=N, m_img=M_img, wo=Wo, tm_i=tm_i, inv_count=1.0 / float(M))
        y_flat = pl.pallas_call(
            kernel,
            out_shape=jax.ShapeDtypeStruct((M, Op), res_dtype),
            grid=(N,),
            in_specs=[
                pl.BlockSpec((None, R_img, K8), lambda n: (n, 0, 0)),   # per-image ZZ
                pl.BlockSpec((2, K8, Op), lambda n: (0, 0, 0)),         # resident weights
                pl.BlockSpec((2, Op), lambda n: (0, 0)),                # gamma / beta
            ],
            out_specs=pl.BlockSpec((M, Op), lambda n: (0, 0)),          # VMEM resident
            scratch_shapes=[pltpu.VMEM((1, Op), jnp.float32),
                            pltpu.VMEM((1, Op), jnp.float32)],
            compiler_params=pltpu.CompilerParams(
                dimension_semantics=("arbitrary",),
                vmem_limit_bytes=vmem_limit),
        )(zz, w2, gb)
        y = y_flat[:, :O].astype(jnp.float32).reshape(N, Ho, Wo, O)
    else:
        interm_dtype = gemm_dtype        # bf16 intermediate halves the round trip
        isz = 2 if interm_dtype == jnp.bfloat16 else 4
        vmem_a = int(min(max(2 * zz_img_bytes + 2 * M_img * Op * isz + 2 * w_bytes
                             + 2 * tm_i * Op * 4 + (8 << 20), 32 << 20), budget))
        kernel_a = functools.partial(_conv_stats_kernel, m_img=M_img, wo=Wo, tm_i=tm_i)
        conv, stats = pl.pallas_call(
            kernel_a,
            out_shape=(jax.ShapeDtypeStruct((N, M_img, Op), interm_dtype),
                       jax.ShapeDtypeStruct((N, 8, Op), jnp.float32)),
            grid=(N,),
            in_specs=[
                pl.BlockSpec((None, R_img, K8), lambda n: (n, 0, 0)),
                pl.BlockSpec((2, K8, Op), lambda n: (0, 0, 0)),
            ],
            out_specs=(
                pl.BlockSpec((None, M_img, Op), lambda n: (n, 0, 0)),
                pl.BlockSpec((None, 8, Op), lambda n: (n, 0, 0)),
            ),
            compiler_params=pltpu.CompilerParams(
                dimension_semantics=("parallel",),           # both TCs on v7x
                vmem_limit_bytes=vmem_a),
        )(zz, w2)

        # Tiny statistic finalize in plain JAX (exact full-batch stats).
        total = jnp.sum(stats[:, 0, :], axis=0, keepdims=True)
        total_sq = jnp.sum(stats[:, 1, :], axis=0, keepdims=True)
        mean = total / M
        var = jnp.maximum(total_sq / M - mean * mean, 0.0)
        scale = gamma_p * lax.rsqrt(var + _EPS)
        shift = beta_p - mean * scale
        ss = jnp.concatenate([scale, shift], axis=0)                    # (2, Op)

        vmem_b = int(min(max(2 * M_img * Op * (isz + 4) + (8 << 20), 32 << 20), budget))
        y3 = pl.pallas_call(
            _bn_relu_kernel,
            out_shape=jax.ShapeDtypeStruct((N, M_img, Op), jnp.float32),
            grid=(N,),
            in_specs=[pl.BlockSpec((None, M_img, Op), lambda n: (n, 0, 0)),
                      pl.BlockSpec((2, Op), lambda n: (0, 0))],
            out_specs=pl.BlockSpec((None, M_img, Op), lambda n: (n, 0, 0)),
            compiler_params=pltpu.CompilerParams(
                dimension_semantics=("parallel",),
                vmem_limit_bytes=vmem_b),
        )(conv, ss)
        y = y3[:, :, :O].reshape(N, Ho, Wo, O)

    # Dropout is nn.Identity() (dropout=False default) -> no-op.
    return jnp.transpose(y, (0, 3, 1, 2))


# ----------------------------------------------------------------------------
# Pure-JAX reference for a sanity check.
# ----------------------------------------------------------------------------
def unet_block_reference(x_nchw, weight_ocihw, gamma, beta):
    x = jnp.transpose(x_nchw, (0, 2, 3, 1)).astype(jnp.float32)         # NHWC
    xp = jnp.pad(x, ((0, 0), (1, 1), (1, 1), (0, 0)), mode="reflect")
    w_hwio = jnp.transpose(weight_ocihw, (2, 3, 1, 0)).astype(jnp.float32)
    conv = lax.conv_general_dilated(
        xp, w_hwio, window_strides=(2, 2), padding="VALID",
        dimension_numbers=("NHWC", "HWIO", "NHWC"))
    mean = jnp.mean(conv, axis=(0, 1, 2), keepdims=True)
    var = jnp.mean((conv - mean) ** 2, axis=(0, 1, 2), keepdims=True)
    y = (conv - mean) * lax.rsqrt(var + _EPS) * gamma + beta
    y = jnp.maximum(y, 0.0)
    return jnp.transpose(y, (0, 3, 1, 2))


if __name__ == "__main__":
    key = jax.random.PRNGKey(0)
    N, Cin, H, W = 2, 4, 16, 16
    Cout = 8

    kx, kw = jax.random.split(key)
    x = jax.random.normal(kx, (N, Cin, H, W), dtype=jnp.float32)
    weight = 0.1 * jax.random.normal(kw, (Cout, Cin, 4, 4), dtype=jnp.float32)
    gamma = jnp.ones((Cout,), dtype=jnp.float32)   # BatchNorm2d default weight
    beta = jnp.zeros((Cout,), dtype=jnp.float32)   # BatchNorm2d default bias

    ref = jax.block_until_ready(unet_block_reference(x, weight, gamma, beta))

    # 1) Default fused path (bf16 GEMM, f32-resident conv output, no HBM round trip).
    out = jax.block_until_ready(unet_block_forward(x, weight, gamma, beta))
    assert out.shape == (N, Cout, H // 2, W // 2), out.shape
    err = float(jnp.max(jnp.abs(out - ref)))
    assert err < 2e-2, err

    # 2) Fused path with a bf16-resident buffer (v7x-style VMEM saving).
    out_b = jax.block_until_ready(
        unet_block_forward(x, weight, gamma, beta, force_bf16_resident=True))
    err = float(jnp.max(jnp.abs(out_b - ref)))
    assert err < 3e-2, err

    # 3) Two-pass fallback path (used at very large M; megacore-parallel).
    out_2p = jax.block_until_ready(
        unet_block_forward(x, weight, gamma, beta, force_two_pass=True))
    err = float(jnp.max(jnp.abs(out_2p - ref)))
    assert err < 3e-2, err

    # 4) f32 GEMM path for a tighter numerical check.
    out_f32 = jax.block_until_ready(
        unet_block_forward(x, weight, gamma, beta, use_bf16=False))
    err = float(jnp.max(jnp.abs(out_f32 - ref)))
    assert err < 1e-3, err

    print("KERNEL_OK")
</pallas_src>

<mosaic_0001>
module attributes {stable_mosaic.version = 11 : i64} {
  func.func @_fused_conv_bn_relu_kernel(%arg0: i32, %arg1: memref<1x72x32xbf16, #tpu.memory_space<vmem>>, %arg2: memref<2x32x128xbf16, #tpu.memory_space<vmem>>, %arg3: memref<2x128xf32, #tpu.memory_space<vmem>>, %arg4: memref<128x128xf32, #tpu.memory_space<vmem>>, %arg5: memref<1x128xf32, #tpu.memory_space<vmem>>, %arg6: memref<1x128xf32, #tpu.memory_space<vmem>>) attributes {dimension_semantics = [#tpu.dimension_semantics<arbitrary>], iteration_bounds = array<i64: 2>, scalar_prefetch = 0 : i64, scratch_operands = 2 : i64, tpu.core_type = #tpu.core_type<tc>, window_params = [{transform_indices = @transform_0, window_bounds = array<i64: 1, 72, 32>}, {pipeline_mode = #tpu.pipeline_mode<synchronous>, transform_indices = @transform_1, window_bounds = array<i64: 2, 32, 128>}, {pipeline_mode = #tpu.pipeline_mode<synchronous>, transform_indices = @transform_2, window_bounds = array<i64: 2, 128>}, {pipeline_mode = #tpu.pipeline_mode<synchronous>, transform_indices = @transform_3, window_bounds = array<i64: 128, 128>}]} {
    %c0_i32 = arith.constant 0 : i32
    %0 = arith.cmpi eq, %arg0, %c0_i32 : i32
    %1 = arith.extui %0 : i1 to i32
    %c0_i32_0 = arith.constant 0 : i32
    %2 = arith.cmpi ne, %1, %c0_i32_0 : i32
    scf.if %2 {
      %cst_27 = arith.constant 0.000000e+00 : f32
      %39 = vector.broadcast %cst_27 : f32 to vector<1x128xf32>
      %c0_28 = arith.constant 0 : index
      %c0_29 = arith.constant 0 : index
      %40 = vector.load %arg5[%c0_28, %c0_29] : memref<1x128xf32, #tpu.memory_space<vmem>>, vector<1x128xf32>
      tpu.vector_store %arg5[%c0_28, %c0_29], %39 {strides = array<i32>} : memref<1x128xf32, #tpu.memory_space<vmem>>, vector<1x128xf32>,
      %cst_30 = arith.constant 0.000000e+00 : f32
      %41 = vector.broadcast %cst_30 : f32 to vector<1x128xf32>
      %c0_31 = arith.constant 0 : index
      %c0_32 = arith.constant 0 : index
      %42 = vector.load %arg6[%c0_31, %c0_32] : memref<1x128xf32, #tpu.memory_space<vmem>>, vector<1x128xf32>
      tpu.vector_store %arg6[%c0_31, %c0_32], %41 {strides = array<i32>} : memref<1x128xf32, #tpu.memory_space<vmem>>, vector<1x128xf32>,
    } else {
    }
    %c64_i32 = arith.constant 64 : i32
    %3 = arith.muli %arg0, %c64_i32 : i32
    %c0_i32_1 = arith.constant 0 : i32
    %c1_i32 = arith.constant 1 : i32
    %4 = arith.muli %c0_i32_1, %c1_i32 : i32
    %c0_i32_2 = arith.constant 0 : i32
    %5 = arith.addi %c0_i32_2, %4 : i32
    %c64_i32_3 = arith.constant 64 : i32
    %6 = arith.muli %5, %c64_i32_3 : i32
    %7 = tpu.assume_multiple %6, 64 : i32
    %c0 = arith.constant 0 : index
    %8 = arith.index_cast %7 : i32 to index
    %c0_4 = arith.constant 0 : index
    %9 = vector.load %arg1[%c0, %8, %c0_4] : memref<1x72x32xbf16, #tpu.memory_space<vmem>>, vector<1x64x32xbf16>
    %10 = vector.shape_cast %9 : vector<1x64x32xbf16> to vector<64x32xbf16>
    %c8_i32 = arith.constant 8 : i32
    %11 = arith.addi %7, %c8_i32 : i32
    %c0_5 = arith.constant 0 : index
    %12 = arith.index_cast %11 : i32 to index
    %c0_6 = arith.constant 0 : index
    %13 = vector.load %arg1[%c0_5, %12, %c0_6] : memref<1x72x32xbf16, #tpu.memory_space<vmem>>, vector<1x64x32xbf16>
    %14 = vector.shape_cast %13 : vector<1x64x32xbf16> to vector<64x32xbf16>
    %c0_7 = arith.constant 0 : index
    %c0_8 = arith.constant 0 : index
    %c0_9 = arith.constant 0 : index
    %15 = vector.load %arg2[%c0_7, %c0_8, %c0_9] : memref<2x32x128xbf16, #tpu.memory_space<vmem>>, vector<1x32x128xbf16>
    %16 = vector.shape_cast %15 : vector<1x32x128xbf16> to vector<32x128xbf16>
    %cst = arith.constant dense<0.000000e+00> : vector<64x128xf32>
    %17 = tpu.matmul %10, %16, %cst {dimension_numbers = #tpu.dot_dimension_numbers<[1], [0], [0], [1], [0, 0, 1, 1], [], []>} : vector<64x32xbf16>, vector<32x128xbf16>, vector<64x128xf32> -> vector<64x128xf32>
    %c1 = arith.constant 1 : index
    %c0_10 = arith.constant 0 : index
    %c0_11 = arith.constant 0 : index
    %18 = vector.load %arg2[%c1, %c0_10, %c0_11] : memref<2x32x128xbf16, #tpu.memory_space<vmem>>, vector<1x32x128xbf16>
    %19 = vector.shape_cast %18 : vector<1x32x128xbf16> to vector<32x128xbf16>
    %cst_12 = arith.constant dense<0.000000e+00> : vector<64x128xf32>
    %20 = tpu.matmul %14, %19, %cst_12 {dimension_numbers = #tpu.dot_dimension_numbers<[1], [0], [0], [1], [0, 0, 1, 1], [], []>} : vector<64x32xbf16>, vector<32x128xbf16>, vector<64x128xf32> -> vector<64x128xf32>
    %21 = arith.addf %17, %20 : vector<64x128xf32>
    %c0_13 = arith.constant 0 : index
    %c0_14 = arith.constant 0 : index
    %22 = vector.load %arg5[%c0_13, %c0_14] : memref<1x128xf32, #tpu.memory_space<vmem>>, vector<1x128xf32>
    %cst_15 = arith.constant dense<0.000000e+00> : vector<128xf32>
    %23 = vector.multi_reduction <add>, %21, %cst_15 [0] : vector<64x128xf32> to vector<128xf32>
    %24 = vector.shape_cast %23 : vector<128xf32> to vector<1x128xf32>
    %25 = arith.addf %22, %24 : vector<1x128xf32>
    %c0_16 = arith.constant 0 : index
    %c0_17 = arith.constant 0 : index
    %26 = vector.load %arg5[%c0_16, %c0_17] : memref<1x128xf32, #tpu.memory_space<vmem>>, vector<1x128xf32>
    tpu.vector_store %arg5[%c0_16, %c0_17], %25 {strides = array<i32>} : memref<1x128xf32, #tpu.memory_space<vmem>>, vector<1x128xf32>,
    %c0_18 = arith.constant 0 : index
    %c0_19 = arith.constant 0 : index
    %27 = vector.load %arg6[%c0_18, %c0_19] : memref<1x128xf32, #tpu.memory_space<vmem>>, vector<1x128xf32>
    %28 = arith.mulf %21, %21 : vector<64x128xf32>
    %cst_20 = arith.constant dense<0.000000e+00> : vector<128xf32>
    %29 = vector.multi_reduction <add>, %28, %cst_20 [0] : vector<64x128xf32> to vector<128xf32>
    %30 = vector.shape_cast %29 : vector<128xf32> to vector<1x128xf32>
    %31 = arith.addf %27, %30 : vector<1x128xf32>
    %c0_21 = arith.constant 0 : index
    %c0_22 = arith.constant 0 : index
    %32 = vector.load %arg6[%c0_21, %c0_22] : memref<1x128xf32, #tpu.memory_space<vmem>>, vector<1x128xf32>
    tpu.vector_store %arg6[%c0_21, %c0_22], %31 {strides = array<i32>} : memref<1x128xf32, #tpu.memory_space<vmem>>, vector<1x128xf32>,
    %33 = arith.addi %3, %7 : i32
    %34 = arith.index_cast %33 : i32 to index
    %c0_23 = arith.constant 0 : index
    %35 = vector.load %arg4[%34, %c0_23] : memref<128x128xf32, #tpu.memory_space<vmem>>, vector<64x128xf32>
    tpu.vector_store %arg4[%34, %c0_23], %21 {strides = array<i32>} : memref<128x128xf32, #tpu.memory_space<vmem>>, vector<64x128xf32>,
    %c1_i32_24 = arith.constant 1 : i32
    %c1_i32_25 = arith.constant 1 : i32
    %36 = arith.cmpi eq, %arg0, %c1_i32_25 : i32
    %37 = arith.extui %36 : i1 to i32
    %c0_i32_26 = arith.constant 0 : i32
    %38 = arith.cmpi ne, %37, %c0_i32_26 : i32
    scf.if %38 {
      %c0_27 = arith.constant 0 : index
      %c0_28 = arith.constant 0 : index
      %39 = vector.load %arg5[%c0_27, %c0_28] : memref<1x128xf32, #tpu.memory_space<vmem>>, vector<1x128xf32>
      %cst_29 = arith.constant 7.812500e-03 : f32
      %40 = vector.broadcast %cst_29 : f32 to vector<1x128xf32>
      %41 = arith.mulf %39, %40 : vector<1x128xf32>
      %c0_30 = arith.constant 0 : index
      %c0_31 = arith.constant 0 : index
      %42 = vector.load %arg6[%c0_30, %c0_31] : memref<1x128xf32, #tpu.memory_space<vmem>>, vector<1x128xf32>
      %cst_32 = arith.constant 7.812500e-03 : f32
      %43 = vector.broadcast %cst_32 : f32 to vector<1x128xf32>
      %44 = arith.mulf %42, %43 : vector<1x128xf32>
      %45 = arith.mulf %41, %41 : vector<1x128xf32>
      %46 = arith.subf %44, %45 : vector<1x128xf32>
      %cst_33 = arith.constant 0.000000e+00 : f32
      %47 = vector.broadcast %cst_33 : f32 to vector<1x128xf32>
      %48 = arith.maximumf %46, %47 : vector<1x128xf32>
      %c0_34 = arith.constant 0 : index
      %c0_35 = arith.constant 0 : index
      %49 = vector.load %arg3[%c0_34, %c0_35] : memref<2x128xf32, #tpu.memory_space<vmem>>, vector<1x128xf32>
      %cst_36 = arith.constant 9.99999974E-6 : f32
      %50 = vector.broadcast %cst_36 : f32 to vector<1x128xf32>
      %51 = arith.addf %48, %50 : vector<1x128xf32>
      %52 = math.rsqrt %51 : vector<1x128xf32>
      %53 = arith.mulf %49, %52 : vector<1x128xf32>
      %c1_37 = arith.constant 1 : index
      %c0_38 = arith.constant 0 : index
      %54 = vector.load %arg3[%c1_37, %c0_38] : memref<2x128xf32, #tpu.memory_space<vmem>>, vector<1x128xf32>
      %55 = arith.mulf %41, %53 : vector<1x128xf32>
      %56 = arith.subf %54, %55 : vector<1x128xf32>
      %c0_i32_39 = arith.constant 0 : i32
      %c2_i32 = arith.constant 2 : i32
      %57 = arith.addi %c0_i32_39, %c2_i32 : i32
      %c1_i32_40 = arith.constant 1 : i32
      scf.for %arg7 = %c0_i32_39 to %57 step %c1_i32_40  : i32 {
        %c1_i32_42 = arith.constant 1 : i32
        %58 = arith.muli %arg7, %c1_i32_42 : i32
        %c0_i32_43 = arith.constant 0 : i32
        %59 = arith.addi %c0_i32_43, %58 : i32
        %c64_i32_44 = arith.constant 64 : i32
        %60 = arith.muli %59, %c64_i32_44 : i32
        %61 = tpu.assume_multiple %60, 64 : i32
        %62 = arith.index_cast %61 : i32 to index
        %c0_45 = arith.constant 0 : index
        %63 = vector.load %arg4[%62, %c0_45] : memref<128x128xf32, #tpu.memory_space<vmem>>, vector<64x128xf32>
        %64 = vector.broadcast %53 : vector<1x128xf32> to vector<64x128xf32>
        %65 = arith.mulf %63, %64 : vector<64x128xf32>
        %66 = vector.broadcast %56 : vector<1x128xf32> to vector<64x128xf32>
        %67 = arith.addf %65, %66 : vector<64x128xf32>
        %cst_46 = arith.constant 0.000000e+00 : f32
        %68 = vector.broadcast %cst_46 : f32 to vector<64x128xf32>
        %69 = arith.maximumf %67, %68 : vector<64x128xf32>
        %70 = arith.index_cast %61 : i32 to index
        %c0_47 = arith.constant 0 : index
        %71 = vector.load %arg4[%70, %c0_47] : memref<128x128xf32, #tpu.memory_space<vmem>>, vector<64x128xf32>
        tpu.vector_store %arg4[%70, %c0_47], %69 {strides = array<i32>} : memref<128x128xf32, #tpu.memory_space<vmem>>, vector<64x128xf32>,
      }
      %c2_i32_41 = arith.constant 2 : i32
    } else {
    }
    return
  }
  func.func @transform_0(%arg0: i32) -> (i32, i32, i32) {
    %c0_i32 = arith.constant 0 : i32
    %c0_i32_0 = arith.constant 0 : i32
    %c0_i32_1 = arith.constant 0 : i32
    return %arg0, %c0_i32, %c0_i32_0 : i32, i32, i32
  }
  func.func @transform_1(%arg0: i32) -> (i32, i32, i32) {
    %c0_i32 = arith.constant 0 : i32
    %c0_i32_0 = arith.constant 0 : i32
    %c0_i32_1 = arith.constant 0 : i32
    %c0_i32_2 = arith.constant 0 : i32
    return %c0_i32, %c0_i32_0, %c0_i32_1 : i32, i32, i32
  }
  func.func @transform_2(%arg0: i32) -> (i32, i32) {
    %c0_i32 = arith.constant 0 : i32
    %c0_i32_0 = arith.constant 0 : i32
    %c0_i32_1 = arith.constant 0 : i32
    return %c0_i32, %c0_i32_0 : i32, i32
  }
  func.func @transform_3(%arg0: i32) -> (i32, i32) {
    %c0_i32 = arith.constant 0 : i32
    %c0_i32_0 = arith.constant 0 : i32
    %c0_i32_1 = arith.constant 0 : i32
    return %c0_i32, %c0_i32_0 : i32, i32
  }
}

</mosaic_0001>

<llo_original>
// kernel: tpu_custom_call.1
$region0: #{tpu_custom_call.1}
  #allocation0 [shape = 'u32[]', space=smem, size = 0x4, offset = 0x4, fixed_abs, tag = 'smem constant byte address 0x4 - core index']
  #allocation1 [shape = 'u32[72,128]{1,0:T(1,128)}', space=vmem, size = 0x9000, scoped, tag = 'internal scratch']
  #allocation2 [shape = 'f32[1,128]{1,0:T(1,128)}', space=vmem, size = 0x200, scoped, tag = 'scratch operand']
  #allocation3 [shape = 'f32[1,128]{1,0:T(1,128)}', space=vmem, size = 0x200, scoped, tag = 'scratch operand']
  %s0 = inlined_call_operand.vmem [shape: bf16[2,72,32], index: 0, kind: input, shape index: {}]
  %s1 = inlined_call_operand.vmem [shape: bf16[2,32,128], index: 1, kind: input, shape index: {}]
  %s2 = inlined_call_operand.vmem [shape: f32[2,128], index: 2, kind: input, shape index: {}]
  %s3 = inlined_call_operand.hbm [shape: f32[128,128], index: 3, kind: output, shape index: {}]
  %s4 = sld [smem:[#allocation0]]
  $region60: #{tpu_custom_call.1} parent=0
    _
  %s6 = ssub.s32 1, %s4
  %s7 = scalar_select 0, %s6, %s4
  $region1: #{tpu_custom_call.1} parent=0
    #allocation4 [shape = 'u8[65536]{0}', space=vmem, size = 0x10000, scoped, tag = 'output window, operand 0, single buffered']
    #allocation5 [shape = 's32[2]{0}', space=sflag, size = 0x8, scoped, tag = 'scoped memory for tpu_custom_call.1']
    %8 = vsyncpa [#allocation5], 0
    loop: start=0, step=1, limit=4
    $region2: #{tpu_custom_call.1} parent=1 // loop_pre_header
      _
    $region3: #{tpu_custom_call.1} parent=1 // loop_header
      %s10 = sphi 0, %s14
      %p11 = scmp.ge.s32.totalorder %s10, 4
      %s20 = sphi 0, %s22
      %s23 = sphi 0, %s20
      %s24 = sphi 0, %s23
      %s40 = sphi 0, %s24
      %s44 = sphi 0, %s44
      %s46 = sphi 0, %s44
      %s47 = sphi 0, %s46
      %s61 = sphi 0, %s47
      %s65 = sphi 0, %s65
      %s67 = sphi 0, %s65
      %s68 = sphi 0, %s67
      %s82 = sphi 0, %s68
      %s86 = sphi 0, %s86
      %s88 = sphi 0, %s86
      %s89 = sphi 0, %s88
      %s103 = sphi 0, %s89
    $region4: #{tpu_custom_call.1} parent=1 // loop_header_branch
      %13 = sbr.rel (%p11) target = $region8
    $region5: #{tpu_custom_call.1} parent=1 // loop_body
      %s15 = ssub.s32 %s10, 1
      %s16 = ssub.s32 %s10, 2
      %s17 = sadd.s32 %s10, 1
      %s18 = ssub.s32 %s10, %s17
      %p19 = scmp.eq.s32.totalorder %s18, 0
      %s21 = sadd.s32 %s20, 1
      %s22 = scalar_select %p19, %s20, %s21
      %p25 = pneg %p19
      %p26 = scmp.eq.s32.totalorder %s10, 1
      %p27 = por %p25, %p26
      %p28 = scmp.ne.s32.totalorder %s20, %s23
      %p29 = scmp.eq.s32.totalorder %s10, 0
      %p30 = por %p28, %p29
      %p31 = scmp.ne.s32.totalorder %s20, %s23
      %p32 = scmp.eq.s32.totalorder %s15, 1
      %p33 = por %p31, %p32
      %p34 = scmp.ne.s32.totalorder %s23, %s24
      %p35 = scmp.eq.s32.totalorder %s15, 0
      %p36 = por %p34, %p35
      %p37 = scmp.ne.s32.totalorder %s23, %s24
      %p38 = scmp.eq.s32.totalorder %s16, 1
      %p39 = por %p37, %p38
      %p41 = scmp.ne.s32.totalorder %s24, %s40
      %p42 = scmp.eq.s32.totalorder %s16, 0
      %p43 = por %p41, %p42
      %s45 = sadd.s32 %s44, 1
      %p48 = scmp.eq.s32.totalorder %s10, 1
      %p49 = scmp.ne.s32.totalorder %s44, %s46
      %p50 = scmp.eq.s32.totalorder %s10, 0
      %p51 = por %p49, %p50
      %p52 = scmp.ne.s32.totalorder %s44, %s46
      %p53 = scmp.eq.s32.totalorder %s15, 1
      %p54 = por %p52, %p53
      %p55 = scmp.ne.s32.totalorder %s46, %s47
      %p56 = scmp.eq.s32.totalorder %s15, 0
      %p57 = por %p55, %p56
      %p58 = scmp.ne.s32.totalorder %s46, %s47
      %p59 = scmp.eq.s32.totalorder %s16, 1
      %p60 = por %p58, %p59
      %p62 = scmp.ne.s32.totalorder %s47, %s61
      %p63 = scmp.eq.s32.totalorder %s16, 0
      %p64 = por %p62, %p63
      %s66 = sadd.s32 %s65, 1
      %p69 = scmp.eq.s32.totalorder %s10, 1
      %p70 = scmp.ne.s32.totalorder %s65, %s67
      %p71 = scmp.eq.s32.totalorder %s10, 0
      %p72 = por %p70, %p71
      %p73 = scmp.ne.s32.totalorder %s65, %s67
      %p74 = scmp.eq.s32.totalorder %s15, 1
      %p75 = por %p73, %p74
      %p76 = scmp.ne.s32.totalorder %s67, %s68
      %p77 = scmp.eq.s32.totalorder %s15, 0
      %p78 = por %p76, %p77
      %p79 = scmp.ne.s32.totalorder %s67, %s68
      %p80 = scmp.eq.s32.totalorder %s16, 1
      %p81 = por %p79, %p80
      %p83 = scmp.ne.s32.totalorder %s68, %s82
      %p84 = scmp.eq.s32.totalorder %s16, 0
      %p85 = por %p83, %p84
      %s87 = sadd.s32 %s86, 1
      %p90 = scmp.eq.s32.totalorder %s10, 1
      %p91 = scmp.ne.s32.totalorder %s86, %s88
      %p92 = scmp.eq.s32.totalorder %s10, 0
      %p93 = por %p91, %p92
      %p94 = scmp.ne.s32.totalorder %s86, %s88
      %p95 = scmp.eq.s32.totalorder %s15, 1
      %p96 = por %p94, %p95
      %p97 = scmp.ne.s32.totalorder %s88, %s89
      %p98 = scmp.eq.s32.totalorder %s15, 0
      %p99 = por %p97, %p98
      %p100 = scmp.ne.s32.totalorder %s88, %s89
      %p101 = scmp.eq.s32.totalorder %s16, 1
      %p102 = por %p100, %p101
      %p104 = scmp.ne.s32.totalorder %s89, %s103
      %p105 = scmp.eq.s32.totalorder %s16, 0
      %p106 = por %p104, %p105
      %p107 = scmp.le.s32.totalorder 1, %s10
      %p108 = scmp.lt.s32.totalorder %s10, 3
      %p109 = pnand %p107, %p108
      %p110 = pneg %p109
      // Predicated region
      $region9: #{tpu_custom_call.1} parent=5 // pred_check
        _
      $region10: #{tpu_custom_call.1} parent=5 // pred_check_branch
        %112 = sbr.rel (%p109) target = $region12
      $region11: #{tpu_custom_call.1} parent=5 // pred_region
        %s113 = ssub.s32 %s10, 1
        // Predicated region
        $region13: #{tpu_custom_call.1} parent=11 // pred_check
          %p114 = pneg %p57
        $region14: #{tpu_custom_call.1} parent=11 // pred_check_branch
          %116 = sbr.rel (%p114) target = $region16
        $region15: #{tpu_custom_call.1} parent=11 // pred_region
          _
        $region16: #{tpu_custom_call.1} parent=11 // pred_fallthru
          _
        // Predicated region
        $region17: #{tpu_custom_call.1} parent=11 // pred_check
          %p117 = pneg %p78
        $region18: #{tpu_custom_call.1} parent=11 // pred_check_branch
          %119 = sbr.rel (%p117) target = $region20
        $region19: #{tpu_custom_call.1} parent=11 // pred_region
          _
        $region20: #{tpu_custom_call.1} parent=11 // pred_fallthru
          _
      $region12: #{tpu_custom_call.1} parent=5 // pred_fallthru
        _
      %p120 = scmp.lt.s32.totalorder %s10, 2
      // Predicated region
      $region21: #{tpu_custom_call.1} parent=5 // pred_check
        %p121 = pneg %p120
      $region22: #{tpu_custom_call.1} parent=5 // pred_check_branch
        %123 = sbr.rel (%p121) target = $region24
      $region23: #{tpu_custom_call.1} parent=5 // pred_region
        // Predicated region
        $region25: #{tpu_custom_call.1} parent=23 // pred_check
          %p124 = pneg %p30
        $region26: #{tpu_custom_call.1} parent=23 // pred_check_branch
          %126 = sbr.rel (%p124) target = $region28
        $region27: #{tpu_custom_call.1} parent=23 // pred_region
          %p127 = scmp.lt.s32.totalorder %s10, 1
          %s128 = scalar_select %p127, %s10, 1
          %s129 = smul.addr %s128, 9
          %s130 = smul.addr %s129, 4
          %s131 = scalar_lea.vmem %s0, %s130
        $region28: #{tpu_custom_call.1} parent=23 // pred_fallthru
          _
      $region24: #{tpu_custom_call.1} parent=5 // pred_fallthru
        _
      %p132 = scmp.le.s32.totalorder 1, %s10
      %p133 = scmp.lt.s32.totalorder %s10, 3
      %p134 = pnand %p132, %p133
      %p135 = pneg %p134
      // Predicated region
      $region29: #{tpu_custom_call.1} parent=5 // pred_check
        _
      $region30: #{tpu_custom_call.1} parent=5 // pred_check_branch
        %137 = sbr.rel (%p134) target = $region32
      $region31: #{tpu_custom_call.1} parent=5 // pred_region
        %s138 = ssub.s32 %s10, 1
        %p139 = scmp.lt.s32.totalorder %s15, 1
        %s140 = scalar_select %p139, %s15, 1
        %s141 = smul.addr %s140, 9
        %s142 = smul.addr %s141, 4
        %s143 = scalar_lea.vmem %s0, %s142
        %p144 = pneg %p36
        %p145 = pneg %p33
        %p146 = pneg %p57
        %p147 = pneg %p54
        %p148 = pneg %p78
        %p149 = pneg %p75
        %p150 = pneg %p99
        %p151 = pneg %p96
        %p152 = scmp.lt.s32.totalorder %s15, 1
        %s153 = scalar_select %p152, %s15, 1
        %s154 = smul.addr %s153, 9
        %s155 = smul.addr %s154, 4
        %s156 = scalar_lea.vmem %s0, %s155
        %p158 = scmp.eq.s32.totalorder %s15, 0
        // Predicated region
        $region33: #{tpu_custom_call.1} parent=31 // pred_check
          %p159 = pneg %p158
        $region34: #{tpu_custom_call.1} parent=31 // pred_check_branch
          %161 = sbr.rel (%p159) target = $region36
        $region35: #{tpu_custom_call.1} parent=31 // pred_region
          %162 = vst [vmem:[#allocation2] sm:$0x1] 0.0
          %163 = vst [vmem:[#allocation3] sm:$0x1] 0.0
        $region36: #{tpu_custom_call.1} parent=31 // pred_fallthru
          _
        %s164 = smul.u32 %s15, 64
        %v165 = vld [vmem:[%s156] sm:$0xf]
        %v166 = vld [vmem:[%s156 + $0x4] sm:$0xf]
        %v167 = vld [vmem:[%s156 + $0x8] sm:$0xf]
        %v168 = vld [vmem:[%s156 + $0xc] sm:$0xf]
        %v169 = vld [vmem:[%s156 + $0x10] sm:$0xf]
        %v170 = vld [vmem:[%s156 + $0x14] sm:$0xf]
        %v171 = vld [vmem:[%s156 + $0x18] sm:$0xf]
        %v172 = vld [vmem:[%s156 + $0x1c] sm:$0xf]
        %s173 = sadd.s32 0, 8
        %s174 = sshra.s32 %s173, 3
        %s175 = sand.u32 %s173, 7
        %s176 = smul.addr %s174, 4
        %s177 = scalar_lea.vmem %s156, %s176
        %v178 = vld [vmem:[%s177] sm:$0xf]
        %v179 = vld [vmem:[%s177 + $0x4] sm:$0xf]
        %v180 = vld [vmem:[%s177 + $0x8] sm:$0xf]
        %v181 = vld [vmem:[%s177 + $0xc] sm:$0xf]
        %v182 = vld [vmem:[%s177 + $0x10] sm:$0xf]
        %v183 = vld [vmem:[%s177 + $0x14] sm:$0xf]
        %v184 = vld [vmem:[%s177 + $0x18] sm:$0xf]
        %v185 = vld [vmem:[%s177 + $0x1c] sm:$0xf]
        %v186 = vld [vmem:[%s1] sm:$0xf]
        %v187 = vld [vmem:[%s1 + $0x4] sm:$0xf]
        %v188 = vld [vmem:[%s1 + $0x8] sm:$0xf]
        %v189 = vld [vmem:[%s1 + $0xc] sm:$0xf]
        %s190 = scalar_lea.vmem %s1, 16
        %v191 = vld [vmem:[%s190] sm:$0xf]
        %v192 = vld [vmem:[%s190 + $0x4] sm:$0xf]
        %v193 = vld [vmem:[%s190 + $0x8] sm:$0xf]
        %v194 = vld [vmem:[%s190 + $0xc] sm:$0xf]
        %v203 = vunpack.c.l.b16 %v178
        %v204 = vunpack.c.l.b16 %v179
        %v205 = vunpack.c.l.b16 %v180
        %v206 = vunpack.c.l.b16 %v181
        %v207 = vunpack.c.l.b16 %v182
        %v208 = vunpack.c.l.b16 %v183
        %v209 = vunpack.c.l.b16 %v184
        %v210 = vunpack.c.l.b16 %v185
        %v211 = vpack.c.b16 %v204, %v203
        %v212 = vpack.c.b16 %v206, %v205
        %v213 = vpack.c.b16 %v208, %v207
        %v214 = vpack.c.b16 %v210, %v209
        %v219 = vunpack.c.l.b16 %v191
        %v220 = vunpack.c.l.b16 %v192
        %v221 = vunpack.c.l.b16 %v193
        %v222 = vunpack.c.l.b16 %v194
        %v223 = vpack.c.b16 %v220, %v219
        %v224 = vpack.c.b16 %v222, %v221
        %vm227 = vcmask 261120
        %v229 = vsel %vm227, %v211, 0
        %v232 = vsel %vm227, %v212, 0
        %v235 = vsel %vm227, %v213, 0
        %v238 = vsel %vm227, %v214, 0
        %240 = vmatpush.bf16.msra.mxu0 0
        %241 = vmatpush.bf16.msra.mxu0 0
        %242 = vmatpush.bf16.msra.mxu0 0
        %243 = vmatpush.bf16.msra.mxu0 0
        %244 = vmatpush.bf16.msra.mxu0 0
        %245 = vmatpush.bf16.msra.mxu0 0
        %246 = vmatpush.bf16.msra.mxu0 %v224
        %247 = vmatpush.bf16.msra.mxu0 %v223
        %248 = vmatmul.bf16.gmra.mxu0 %v229
        %v249 = vpop.f32.mrf.mxu0
        %v250 = vadd.f32 0.0, %v249
        %v251 = vpop.f32.mrf.mxu0
        %v252 = vadd.f32 0.0, %v251
        %253 = vmatmul.bf16.gmra.mxu0 %v232
        %v254 = vpop.f32.mrf.mxu0
        %v255 = vadd.f32 0.0, %v254
        %v256 = vpop.f32.mrf.mxu0
        %v257 = vadd.f32 0.0, %v256
        %258 = vmatmul.bf16.gmra.mxu0 %v235
        %v259 = vpop.f32.mrf.mxu0
        %v260 = vadd.f32 0.0, %v259
        %v261 = vpop.f32.mrf.mxu0
        %v262 = vadd.f32 0.0, %v261
        %263 = vmatmul.bf16.gmra.mxu0 %v238
        %v264 = vpop.f32.mrf.mxu0
        %v265 = vadd.f32 0.0, %v264
        %v266 = vpop.f32.mrf.mxu0
        %v267 = vadd.f32 0.0, %v266
        %268 = vdwg.mxu0
        %v277 = vunpack.c.l.b16 %v165
        %v278 = vunpack.c.l.b16 %v166
        %v279 = vunpack.c.l.b16 %v167
        %v280 = vunpack.c.l.b16 %v168
        %v281 = vunpack.c.l.b16 %v169
        %v282 = vunpack.c.l.b16 %v170
        %v283 = vunpack.c.l.b16 %v171
        %v284 = vunpack.c.l.b16 %v172
        %v285 = vpack.c.b16 %v278, %v277
        %v286 = vpack.c.b16 %v280, %v279
        %v287 = vpack.c.b16 %v282, %v281
        %v288 = vpack.c.b16 %v284, %v283
        %v293 = vunpack.c.l.b16 %v186
        %v294 = vunpack.c.l.b16 %v187
        %v295 = vunpack.c.l.b16 %v188
        %v296 = vunpack.c.l.b16 %v189
        %v297 = vpack.c.b16 %v294, %v293
        %v298 = vpack.c.b16 %v296, %v295
        %v302 = vsel %vm227, %v285, 0
        %v305 = vsel %vm227, %v286, 0
        %v308 = vsel %vm227, %v287, 0
        %v311 = vsel %vm227, %v288, 0
        %313 = vmatpush.bf16.msra.mxu0 0
        %314 = vmatpush.bf16.msra.mxu0 0
        %315 = vmatpush.bf16.msra.mxu0 0
        %316 = vmatpush.bf16.msra.mxu0 0
        %317 = vmatpush.bf16.msra.mxu0 0
        %318 = vmatpush.bf16.msra.mxu0 0
        %319 = vmatpush.bf16.msra.mxu0 %v298
        %320 = vmatpush.bf16.msra.mxu0 %v297
        %321 = vmatmul.bf16.gmra.mxu0 %v302
        %v322 = vpop.f32.mrf.mxu0
        %v323 = vadd.f32 %v250, %v322
        %v324 = vpop.f32.mrf.mxu0
        %v325 = vadd.f32 %v252, %v324
        %326 = vmatmul.bf16.gmra.mxu0 %v305
        %v327 = vpop.f32.mrf.mxu0
        %v328 = vadd.f32 %v255, %v327
        %v329 = vpop.f32.mrf.mxu0
        %v330 = vadd.f32 %v257, %v329
        %331 = vmatmul.bf16.gmra.mxu0 %v308
        %v332 = vpop.f32.mrf.mxu0
        %v333 = vadd.f32 %v260, %v332
        %v334 = vpop.f32.mrf.mxu0
        %v335 = vadd.f32 %v262, %v334
        %336 = vmatmul.bf16.gmra.mxu0 %v311
        %v337 = vpop.f32.mrf.mxu0
        %v338 = vadd.f32 %v265, %v337
        %v339 = vpop.f32.mrf.mxu0
        %v340 = vadd.f32 %v267, %v339
        %341 = vdwg.mxu0
        %v342 = vld [vmem:[#allocation2] sm:$0x1]
        %v343 = vadd.f32 %v323, %v325
        %v344 = vadd.f32 %v343, %v328
        %v345 = vadd.f32 %v344, %v330
        %v346 = vadd.f32 %v345, %v333
        %v347 = vadd.f32 %v346, %v335
        %v348 = vadd.f32 %v347, %v338
        %v349 = vadd.f32 %v348, %v340
        %v350 = vrot.slane %v349, 4
        %v351 = vadd.f32 %v349, %v350
        %v352 = vrot.slane %v351, 2
        %v353 = vadd.f32 %v351, %v352
        %v354 = vrot.slane %v353, 1
        %v355 = vadd.f32 %v353, %v354
        %v356 = vadd.f32 %v342, %v355
        %357 = vst [vmem:[#allocation2] sm:$0x1] %v356
        %v358 = vld [vmem:[#allocation3] sm:$0x1]
        %v359 = vmul.f32 %v323, %v323
        %v360 = vmul.f32 %v325, %v325
        %v361 = vmul.f32 %v328, %v328
        %v362 = vmul.f32 %v330, %v330
        %v363 = vmul.f32 %v333, %v333
        %v364 = vmul.f32 %v335, %v335
        %v365 = vmul.f32 %v338, %v338
        %v366 = vmul.f32 %v340, %v340
        %v367 = vadd.f32 %v359, %v360
        %v368 = vadd.f32 %v367, %v361
        %v369 = vadd.f32 %v368, %v362
        %v370 = vadd.f32 %v369, %v363
        %v371 = vadd.f32 %v370, %v364
        %v372 = vadd.f32 %v371, %v365
        %v373 = vadd.f32 %v372, %v366
        %v374 = vrot.slane %v373, 4
        %v375 = vadd.f32 %v373, %v374
        %v376 = vrot.slane %v375, 2
        %v377 = vadd.f32 %v375, %v376
        %v378 = vrot.slane %v377, 1
        %v379 = vadd.f32 %v377, %v378
        %v380 = vadd.f32 %v358, %v379
        %381 = vst [vmem:[#allocation3] sm:$0x1] %v380
        %s382 = sadd.s32 %s164, 0
        %s383 = scalar_lea.vmem [#allocation4], %s382
        %384 = vst [vmem:[%s383] sm:$0xff] %v323
        %385 = vst [vmem:[%s383 + $0x8] sm:$0xff] %v325
        %386 = vst [vmem:[%s383 + $0x10] sm:$0xff] %v328
        %387 = vst [vmem:[%s383 + $0x18] sm:$0xff] %v330
        %388 = vst [vmem:[%s383 + $0x20] sm:$0xff] %v333
        %389 = vst [vmem:[%s383 + $0x28] sm:$0xff] %v335
        %390 = vst [vmem:[%s383 + $0x30] sm:$0xff] %v338
        %391 = vst [vmem:[%s383 + $0x38] sm:$0xff] %v340
        %p392 = scmp.eq.s32.totalorder %s15, 1
        // Predicated region
        $region37: #{tpu_custom_call.1} parent=31 // pred_check
          %p393 = pneg %p392
        $region38: #{tpu_custom_call.1} parent=31 // pred_check_branch
          %395 = sbr.rel (%p393) target = $region40
        $region39: #{tpu_custom_call.1} parent=31 // pred_region
          %v396 = vld [vmem:[#allocation2] sm:$0x1]
          %v397 = vmul.f32 %v396, 0.0078125
          %v398 = vld [vmem:[#allocation3] sm:$0x1]
          %v399 = vmul.f32 %v398, 0.0078125
          %v400 = vmul.f32 %v397, %v397
          %v401 = vsub.f32 %v399, %v400
          %v402 = vmax.f32 %v401, 0.0
          %v403 = vld [vmem:[%s2] sm:$0x1]
          %v404 = vadd.f32 %v402, 1e-05
          %v405 = vrsqrt.pop %v404
          %v406 = vmul.f32 %v405, %v404
          %v407 = vmul.f32 %v406, %v405
          %v408 = vmul.f32 0.5, %v407
          %v409 = vsub.f32 1.5, %v408
          %v410 = vmul.f32 %v405, %v409
          %vm411 = vweird.f32 %v404
          %vm412 = vweird.f32 %v405
          %vm413 = vmor %vm411, %vm412
          %v414 = vsel %vm413, %v405, %v410
          %v415 = vmul.f32 %v403, %v414
          %v416 = vld [vmem:[%s2 + $0x1] sm:$0x1]
          %v417 = vmul.f32 %v397, %v415
          %v418 = vsub.f32 %v416, %v417
          loop: start=0, step=1, limit=2
          $region41: #{tpu_custom_call.1} parent=39 // loop_pre_header
            _
          $region42: #{tpu_custom_call.1} parent=39 // loop_header
            %s420 = sphi 0, %s424
            %p421 = scmp.ge.s32.totalorder %s420, 2
          $region43: #{tpu_custom_call.1} parent=39 // loop_header_branch
            %423 = sbr.rel (%p421) target = $region47
          $region44: #{tpu_custom_call.1} parent=39 // loop_body
            %s425 = smul.u32 %s420, 64
            %s426 = scalar_lea.vmem [#allocation4], %s425
            %v427 = vld [vmem:[%s426] sm:$0xff]
            %v428 = vld [vmem:[%s426 + $0x8] sm:$0xff]
            %v429 = vld [vmem:[%s426 + $0x10] sm:$0xff]
            %v430 = vld [vmem:[%s426 + $0x18] sm:$0xff]
            %v431 = vld [vmem:[%s426 + $0x20] sm:$0xff]
            %v432 = vld [vmem:[%s426 + $0x28] sm:$0xff]
            %v433 = vld [vmem:[%s426 + $0x30] sm:$0xff]
            %v434 = vld [vmem:[%s426 + $0x38] sm:$0xff]
            %v435 = vperm.slane %v415, 0
            %v436 = vmul.f32 %v427, %v435
            %v437 = vmul.f32 %v428, %v435
            %v438 = vmul.f32 %v429, %v435
            %v439 = vmul.f32 %v430, %v435
            %v440 = vmul.f32 %v431, %v435
            %v441 = vmul.f32 %v432, %v435
            %v442 = vmul.f32 %v433, %v435
            %v443 = vmul.f32 %v434, %v435
            %v444 = vperm.slane %v418, 0
            %v445 = vadd.f32 %v436, %v444
            %v446 = vadd.f32 %v437, %v444
            %v447 = vadd.f32 %v438, %v444
            %v448 = vadd.f32 %v439, %v444
            %v449 = vadd.f32 %v440, %v444
            %v450 = vadd.f32 %v441, %v444
            %v451 = vadd.f32 %v442, %v444
            %v452 = vadd.f32 %v443, %v444
            %v453 = vmax.f32 %v445, 0.0
            %v454 = vmax.f32 %v446, 0.0
            %v455 = vmax.f32 %v447, 0.0
            %v456 = vmax.f32 %v448, 0.0
            %v457 = vmax.f32 %v449, 0.0
            %v458 = vmax.f32 %v450, 0.0
            %v459 = vmax.f32 %v451, 0.0
            %v460 = vmax.f32 %v452, 0.0
            %461 = vst [vmem:[%s426] sm:$0xff] %v453
            %462 = vst [vmem:[%s426 + $0x8] sm:$0xff] %v454
            %463 = vst [vmem:[%s426 + $0x10] sm:$0xff] %v455
            %464 = vst [vmem:[%s426 + $0x18] sm:$0xff] %v456
            %465 = vst [vmem:[%s426 + $0x20] sm:$0xff] %v457
            %466 = vst [vmem:[%s426 + $0x28] sm:$0xff] %v458
            %467 = vst [vmem:[%s426 + $0x30] sm:$0xff] %v459
            %468 = vst [vmem:[%s426 + $0x38] sm:$0xff] %v460
          $region45: #{tpu_custom_call.1} parent=39 // loop_footer
            %s424 = sadd.s32 1, %s420
          $region46: #{tpu_custom_call.1} parent=39 // loop_footer_branch
            %419 = sbr.rel target = $region42
          $region47: #{tpu_custom_call.1} parent=39 // loop_exit
            _
        $region40: #{tpu_custom_call.1} parent=31 // pred_fallthru
          _
        // Predicated region
        $region48: #{tpu_custom_call.1} parent=31 // pred_check
          %p469 = pneg %p96
        $region49: #{tpu_custom_call.1} parent=31 // pred_check_branch
          %471 = sbr.rel (%p469) target = $region51
        $region50: #{tpu_custom_call.1} parent=31 // pred_region
          %473 = vsyncadd [#allocation5], 0
          %s474 = sshll.u32 [#allocation4], 4
          %s475 = int_to_ptr.vmem [resolvable:$true] %s474
          %s476 = sshll.u32 %s3, 4
          %s477 = int_to_ptr.hbm [resolvable:$true] %s476
          %482 = dma.vmem_to_hbm [thread:$0]  %s475, 2048, %s477, [#allocation5], 128, 128, 8
        $region51: #{tpu_custom_call.1} parent=31 // pred_fallthru
          _
        // Predicated region
        $region52: #{tpu_custom_call.1} parent=31 // pred_check
          %p483 = pneg %p96
        $region53: #{tpu_custom_call.1} parent=31 // pred_check_branch
          %485 = sbr.rel (%p483) target = $region55
        $region54: #{tpu_custom_call.1} parent=31 // pred_region
          %487 = dma.done [#allocation5], 2048
        $region55: #{tpu_custom_call.1} parent=31 // pred_fallthru
          _
      $region32: #{tpu_custom_call.1} parent=5 // pred_fallthru
        _
      %p488 = scmp.le.s32.totalorder 2, %s10
      // Predicated region
      $region56: #{tpu_custom_call.1} parent=5 // pred_check
        %p489 = pneg %p488
      $region57: #{tpu_custom_call.1} parent=5 // pred_check_branch
        %491 = sbr.rel (%p489) target = $region59
      $region58: #{tpu_custom_call.1} parent=5 // pred_region
        %s492 = ssub.s32 %s10, 2
      $region59: #{tpu_custom_call.1} parent=5 // pred_fallthru
        _
    $region6: #{tpu_custom_call.1} parent=1 // loop_footer
      %s14 = sadd.s32 1, %s10
    $region7: #{tpu_custom_call.1} parent=1 // loop_footer_branch
      %9 = sbr.rel target = $region3
    $region8: #{tpu_custom_call.1} parent=1 // loop_exit
      _
    %493 = vsyncpa [#allocation5], 1
    %s494 = scalar_lea.sflag [#allocation5], 1
    %495 = vsyncpa %s494, 1

</llo_original>
